<compile_context>
chip_gen: v7x
topology: tpu7x:2x2x1
jax: 0.10.0
libtpu: 0.0.40
codegen_flags: <defaults>
</compile_context>

<pallas_src>
import functools

import jax
import jax.numpy as jnp
from jax.experimental import pallas as pl
from jax.experimental.pallas import tpu as pltpu

IN_FEATURES = 28 * 28      # 784
HIDDEN = 100
HIDDEN_PAD = 128           # lane-aligned padded hidden width
N_CLASSES = 10             # len(FashionMNIST.classes) == 10
OUT_PAD = 128              # lane-dense padded class width
NEG_BIG = -1e30            # "minus infinity" bias for padded class columns (f32-safe)


def _round_up(n, m):
    return ((n + m - 1) // m) * m


def mlp_kernel(x_ref, w1_ref, b1_ref, w2_ref, b2_ref, o_ref):
    # x_ref:  (tb, 784)  bf16     w1_ref: (784, 128) bf16   b1_ref: (1, 128) f32
    # w2_ref: (128, 128) bf16     b2_ref: (1, 128)   f32    o_ref:  (tb, 128) bf16
    x = x_ref[...]

    # fc1 + sigmoid.  bf16 MXU matmul with f32 accumulation; exp + approx
    # reciprocal run on the EUP (separate bundle slot).  Element-wise math in f32.
    h = jnp.dot(x, w1_ref[...], preferred_element_type=jnp.float32) + b1_ref[...]
    h = pl.reciprocal(1.0 + jnp.exp(-h), approx=True)            # sigmoid, f32

    # Output layer + numerically stable softmax over the 128 padded lanes.
    # Padded class columns have zero weights and a -1e30 bias, so exp() maps
    # them to exactly 0.  Exact divide for the denominator keeps rows summing
    # to 1 and probabilities <= 1.
    logits = jnp.dot(h.astype(jnp.bfloat16), w2_ref[...],
                     preferred_element_type=jnp.float32) + b2_ref[...]
    m = jnp.max(logits, axis=-1, keepdims=True)
    e = jnp.exp(logits - m)
    denom = jnp.sum(e, axis=-1, keepdims=True)
    # TODO(synk): on v7x (post-bandwidth-fix) the two XLU lane reductions become
    # the saturating slot; they could be offloaded to the MXU via e @ ones.
    o_ref[...] = (e / denom).astype(o_ref.dtype)


def _pad_params(w1, b1, w2, b2):
    """Zero-pad hidden dim to 128; pad class dim to 128 with -1e30 bias.

    Weights in bf16 (MXU operands, grid-resident), biases in f32 (added to the
    f32 accumulators).
    """
    w1p = jnp.zeros((IN_FEATURES, HIDDEN_PAD), jnp.float32).at[:, :HIDDEN].set(w1)
    b1p = jnp.zeros((1, HIDDEN_PAD), jnp.float32).at[0, :HIDDEN].set(b1)
    w2p = jnp.zeros((HIDDEN_PAD, OUT_PAD), jnp.float32).at[:HIDDEN, :N_CLASSES].set(w2)
    b2p = jnp.full((1, OUT_PAD), NEG_BIG, jnp.float32).at[0, :N_CLASSES].set(b2)
    return w1p.astype(jnp.bfloat16), b1p, w2p.astype(jnp.bfloat16), b2p


def _choose_tile(batch, tb_max):
    """Pick (tb, b_pad, grid) with an even grid when tiling kicks in (v7x 2-TC)."""
    b8 = _round_up(max(batch, 1), 8)
    if b8 <= tb_max:
        return b8, b8, 1                         # single tile
    grid = pl.cdiv(b8, tb_max)
    if grid % 2:
        grid += 1                                # even split across TensorCores
    tb = _round_up(pl.cdiv(b8, grid), 8)
    return tb, grid * tb, grid


@functools.partial(jax.jit, static_argnames=("tb",))
def fashion_mnist_forward(x_nchw, w1, b1, w2, b2, *, tb=4096):
    """x_nchw: (B, 1, 28, 28).  Returns (B, 10) f32 softmax probabilities."""
    B = x_nchw.shape[0]
    # nn.Flatten + bf16 cast (fused here under jit -> no standalone HBM pass).
    # TODO(synk): ideally accept native uint8 FashionMNIST pixels and
    # normalize inside the kernel to cut the x stream another 2x.
    x2d = x_nchw.reshape(B, IN_FEATURES).astype(jnp.bfloat16)

    tb, b_pad, grid = _choose_tile(B, tb)
    if b_pad != B:
        x2d = jnp.pad(x2d, ((0, b_pad - B), (0, 0)))

    w1p, b1p, w2p, b2p = _pad_params(w1, b1, w2, b2)

    flops = 2 * b_pad * (IN_FEATURES * HIDDEN_PAD + HIDDEN_PAD * OUT_PAD)
    bytes_accessed = (x2d.size * 2 + b_pad * OUT_PAD * 2
                      + w1p.size * 2 + w2p.size * 2 + b1p.size * 4 + b2p.size * 4)
    cost = pl.CostEstimate(flops=flops,
                           transcendentals=b_pad * (HIDDEN_PAD + OUT_PAD),
                           bytes_accessed=bytes_accessed)

    out = pl.pallas_call(
        mlp_kernel,
        out_shape=jax.ShapeDtypeStruct((b_pad, OUT_PAD), jnp.bfloat16),
        grid_spec=pltpu.PrefetchScalarGridSpec(
            num_scalar_prefetch=0,
            grid=(grid,),
            in_specs=[
                pl.BlockSpec((tb, IN_FEATURES), lambda i: (i, 0)),          # x tile (bf16)
                pl.BlockSpec((IN_FEATURES, HIDDEN_PAD), lambda i: (0, 0)),  # W1 (resident)
                pl.BlockSpec((1, HIDDEN_PAD), lambda i: (0, 0)),            # b1
                pl.BlockSpec((HIDDEN_PAD, OUT_PAD), lambda i: (0, 0)),      # W2 (resident)
                pl.BlockSpec((1, OUT_PAD), lambda i: (0, 0)),               # b2
            ],
            out_specs=pl.BlockSpec((tb, OUT_PAD), lambda i: (i, 0)),        # lane-dense out
        ),
        compiler_params=pltpu.CompilerParams(
            dimension_semantics=("parallel",),   # batch tiles shard across TCs (v7x)
            vmem_limit_bytes=48 << 20,           # safe on v7x's 64 MiB physical VMEM
        ),
        cost_estimate=cost,
    )(x2d, w1p, b1p, w2p, b2p)

    return out[:B, :N_CLASSES].astype(jnp.float32)


def _reference(x_nchw, w1, b1, w2, b2):
    x = x_nchw.reshape(x_nchw.shape[0], -1).astype(jnp.float32)
    h = jax.nn.sigmoid(x @ w1 + b1)
    return jax.nn.softmax(h @ w2 + b2, axis=-1)


if __name__ == "__main__":
    key = jax.random.PRNGKey(0)
    k_x, k_w1, k_b1, k_w2, k_b2 = jax.random.split(key, 5)

    # Deterministic params mirroring nn.Linear's U(-1/sqrt(fan_in), 1/sqrt(fan_in)).
    bound1 = 1.0 / (IN_FEATURES ** 0.5)
    bound2 = 1.0 / (HIDDEN ** 0.5)
    w1 = jax.random.uniform(k_w1, (IN_FEATURES, HIDDEN), jnp.float32, -bound1, bound1)
    b1 = jax.random.uniform(k_b1, (HIDDEN,), jnp.float32, -bound1, bound1)
    w2 = jax.random.uniform(k_w2, (HIDDEN, N_CLASSES), jnp.float32, -bound2, bound2)
    b2 = jax.random.uniform(k_b2, (N_CLASSES,), jnp.float32, -bound2, bound2)

    # Small FashionMNIST-shaped batches (NCHW).  (8, default tb) = single tile;
    # (20, default tb) exercises batch padding; (20, tb=8) exercises a
    # multi-tile (even) grid.
    for batch, tile in ((8, 4096), (20, 4096), (20, 8)):
        x = jax.random.normal(k_x, (batch, 1, 28, 28), jnp.float32)
        out = jax.block_until_ready(fashion_mnist_forward(x, w1, b1, w2, b2, tb=tile))
        ref = _reference(x, w1, b1, w2, b2)

        assert out.shape == (batch, N_CLASSES)
        # Tolerances account for bf16 x/W streaming, approx EUP reciprocal in the
        # sigmoid, and bf16 output rounding.
        assert jnp.allclose(out, ref, atol=1e-2, rtol=1e-2), "mismatch vs JAX reference"
        assert jnp.allclose(jnp.sum(out, axis=-1), 1.0, atol=1e-2), "rows must sum to ~1"
        assert bool(jnp.all(out >= 0.0) & jnp.all(out <= 1.0 + 1e-3)), "probabilities out of range"

    print("KERNEL_OK")
</pallas_src>

<mosaic_0001>
module attributes {stable_mosaic.version = 11 : i64} {
  func.func @mlp_kernel(%arg0: i32, %arg1: memref<8x784xbf16, #tpu.memory_space<vmem>>, %arg2: memref<784x128xbf16, #tpu.memory_space<vmem>>, %arg3: memref<1x128xf32, #tpu.memory_space<vmem>>, %arg4: memref<128x128xbf16, #tpu.memory_space<vmem>>, %arg5: memref<1x128xf32, #tpu.memory_space<vmem>>, %arg6: memref<8x128xbf16, #tpu.memory_space<vmem>>) attributes {dimension_semantics = [#tpu.dimension_semantics<parallel>], iteration_bounds = array<i64: 1>, scalar_prefetch = 0 : i64, scratch_operands = 0 : i64, tpu.core_type = #tpu.core_type<tc>, window_params = [{transform_indices = @transform_0, window_bounds = array<i64: 8, 784>}, {pipeline_mode = #tpu.pipeline_mode<synchronous>, transform_indices = @transform_1, window_bounds = array<i64: 784, 128>}, {pipeline_mode = #tpu.pipeline_mode<synchronous>, transform_indices = @transform_2, window_bounds = array<i64: 1, 128>}, {pipeline_mode = #tpu.pipeline_mode<synchronous>, transform_indices = @transform_3, window_bounds = array<i64: 128, 128>}, {pipeline_mode = #tpu.pipeline_mode<synchronous>, transform_indices = @transform_4, window_bounds = array<i64: 1, 128>}, {transform_indices = @transform_5, window_bounds = array<i64: 8, 128>}]} {
    %c0 = arith.constant 0 : index
    %c0_0 = arith.constant 0 : index
    %0 = vector.load %arg1[%c0, %c0_0] : memref<8x784xbf16, #tpu.memory_space<vmem>>, vector<8x784xbf16>
    %c0_1 = arith.constant 0 : index
    %c0_2 = arith.constant 0 : index
    %1 = vector.load %arg2[%c0_1, %c0_2] : memref<784x128xbf16, #tpu.memory_space<vmem>>, vector<784x128xbf16>
    %cst = arith.constant dense<0.000000e+00> : vector<8x128xf32>
    %2 = tpu.matmul %0, %1, %cst {dimension_numbers = #tpu.dot_dimension_numbers<[1], [0], [0], [1], [0, 0, 1, 1], [], []>} : vector<8x784xbf16>, vector<784x128xbf16>, vector<8x128xf32> -> vector<8x128xf32>
    %c0_3 = arith.constant 0 : index
    %c0_4 = arith.constant 0 : index
    %3 = vector.load %arg3[%c0_3, %c0_4] : memref<1x128xf32, #tpu.memory_space<vmem>>, vector<1x128xf32>
    %4 = vector.broadcast %3 : vector<1x128xf32> to vector<8x128xf32>
    %5 = arith.addf %2, %4 : vector<8x128xf32>
    %cst_5 = arith.constant 0.000000e+00 : f32
    %6 = vector.broadcast %cst_5 : f32 to vector<8x128xf32>
    %7 = arith.subf %6, %5 : vector<8x128xf32>
    %8 = math.exp %7 : vector<8x128xf32>
    %cst_6 = arith.constant 1.000000e+00 : f32
    %9 = vector.broadcast %cst_6 : f32 to vector<8x128xf32>
    %10 = arith.addf %9, %8 : vector<8x128xf32>
    %11 = tpu.reciprocal %10 {approx = true} : vector<8x128xf32> -> vector<8x128xf32>
    %12 = arith.truncf %11 : vector<8x128xf32> to vector<8x128xbf16>
    %c0_7 = arith.constant 0 : index
    %c0_8 = arith.constant 0 : index
    %13 = vector.load %arg4[%c0_7, %c0_8] : memref<128x128xbf16, #tpu.memory_space<vmem>>, vector<128x128xbf16>
    %cst_9 = arith.constant dense<0.000000e+00> : vector<8x128xf32>
    %14 = tpu.matmul %12, %13, %cst_9 {dimension_numbers = #tpu.dot_dimension_numbers<[1], [0], [0], [1], [0, 0, 1, 1], [], []>} : vector<8x128xbf16>, vector<128x128xbf16>, vector<8x128xf32> -> vector<8x128xf32>
    %c0_10 = arith.constant 0 : index
    %c0_11 = arith.constant 0 : index
    %15 = vector.load %arg5[%c0_10, %c0_11] : memref<1x128xf32, #tpu.memory_space<vmem>>, vector<1x128xf32>
    %16 = vector.broadcast %15 : vector<1x128xf32> to vector<8x128xf32>
    %17 = arith.addf %14, %16 : vector<8x128xf32>
    %cst_12 = arith.constant dense<0xFF800000> : vector<8xf32>
    %18 = vector.multi_reduction <maximumf>, %17, %cst_12 [1] : vector<8x128xf32> to vector<8xf32>
    %19 = vector.shape_cast %18 : vector<8xf32> to vector<8x1xf32>
    %20 = vector.broadcast %19 : vector<8x1xf32> to vector<8x128xf32>
    %21 = arith.subf %17, %20 : vector<8x128xf32>
    %22 = math.exp %21 : vector<8x128xf32>
    %cst_13 = arith.constant dense<0.000000e+00> : vector<8xf32>
    %23 = vector.multi_reduction <add>, %22, %cst_13 [1] : vector<8x128xf32> to vector<8xf32>
    %24 = vector.shape_cast %23 : vector<8xf32> to vector<8x1xf32>
    %25 = vector.broadcast %24 : vector<8x1xf32> to vector<8x128xf32>
    %26 = arith.divf %22, %25 : vector<8x128xf32>
    %27 = arith.truncf %26 : vector<8x128xf32> to vector<8x128xbf16>
    %c0_14 = arith.constant 0 : index
    %c0_15 = arith.constant 0 : index
    %28 = vector.load %arg6[%c0_14, %c0_15] : memref<8x128xbf16, #tpu.memory_space<vmem>>, vector<8x128xbf16>
    tpu.vector_store %arg6[%c0_14, %c0_15], %27 {strides = array<i32>} : memref<8x128xbf16, #tpu.memory_space<vmem>>, vector<8x128xbf16>,
    return
  }
  func.func @transform_0(%arg0: i32) -> (i32, i32) {
    %c0_i32 = arith.constant 0 : i32
    %c0_i32_0 = arith.constant 0 : i32
    return %arg0, %c0_i32 : i32, i32
  }
  func.func @transform_1(%arg0: i32) -> (i32, i32) {
    %c0_i32 = arith.constant 0 : i32
    %c0_i32_0 = arith.constant 0 : i32
    %c0_i32_1 = arith.constant 0 : i32
    return %c0_i32, %c0_i32_0 : i32, i32
  }
  func.func @transform_2(%arg0: i32) -> (i32, i32) {
    %c0_i32 = arith.constant 0 : i32
    %c0_i32_0 = arith.constant 0 : i32
    %c0_i32_1 = arith.constant 0 : i32
    return %c0_i32, %c0_i32_0 : i32, i32
  }
  func.func @transform_3(%arg0: i32) -> (i32, i32) {
    %c0_i32 = arith.constant 0 : i32
    %c0_i32_0 = arith.constant 0 : i32
    %c0_i32_1 = arith.constant 0 : i32
    return %c0_i32, %c0_i32_0 : i32, i32
  }
  func.func @transform_4(%arg0: i32) -> (i32, i32) {
    %c0_i32 = arith.constant 0 : i32
    %c0_i32_0 = arith.constant 0 : i32
    %c0_i32_1 = arith.constant 0 : i32
    return %c0_i32, %c0_i32_0 : i32, i32
  }
  func.func @transform_5(%arg0: i32) -> (i32, i32) {
    %c0_i32 = arith.constant 0 : i32
    %c0_i32_0 = arith.constant 0 : i32
    return %arg0, %c0_i32 : i32, i32
  }
}

</mosaic_0001>

<llo_original>
// kernel: fashion_mnist_forward.1
$region0: #{fashion_mnist_forward.1}
  #allocation0 [shape = 'u32[]', space=smem, size = 0x4, offset = 0x4, fixed_abs, tag = 'smem constant byte address 0x4 - core index']
  #allocation1 [shape = 'u32[144,128]{1,0:T(1,128)}', space=vmem, size = 0x12000, scoped, tag = 'internal scratch']
  %s0 = inlined_call_operand.vmem [shape: bf16[8,784], index: 0, kind: input, shape index: {}]
  %s1 = inlined_call_operand.vmem [shape: bf16[784,128], index: 1, kind: input, shape index: {}]
  %s2 = inlined_call_operand.vmem [shape: f32[1,128], index: 2, kind: input, shape index: {}]
  %s3 = inlined_call_operand.vmem [shape: bf16[128,128], index: 3, kind: input, shape index: {}]
  %s4 = inlined_call_operand.vmem [shape: f32[1,128], index: 4, kind: input, shape index: {}]
  %s5 = inlined_call_operand.vmem [shape: bf16[8,128], index: 5, kind: output, shape index: {}]
  %s6 = sld [smem:[#allocation0]]
  $region30: #{fashion_mnist_forward.1} parent=0
    _
  %s8 = ssub.s32 1, %s6
  %s9 = scalar_select 0, %s8, %s6
  // Predicated region
  $region2: #{fashion_mnist_forward.1} parent=0 // pred_check
    _
  $region3: #{fashion_mnist_forward.1} parent=0 // pred_check_branch
    %11 = sbr.rel (0) target = $region5
  $region4: #{fashion_mnist_forward.1} parent=0 // pred_region
    _
  $region5: #{fashion_mnist_forward.1} parent=0 // pred_fallthru
    _
  // Predicated region
  $region6: #{fashion_mnist_forward.1} parent=0 // pred_check
    _
  $region7: #{fashion_mnist_forward.1} parent=0 // pred_check_branch
    %13 = sbr.rel (0) target = $region9
  $region8: #{fashion_mnist_forward.1} parent=0 // pred_region
    _
  $region9: #{fashion_mnist_forward.1} parent=0 // pred_fallthru
    _
  // Predicated region
  $region10: #{fashion_mnist_forward.1} parent=0 // pred_check
    _
  $region11: #{fashion_mnist_forward.1} parent=0 // pred_check_branch
    %15 = sbr.rel (0) target = $region13
  $region12: #{fashion_mnist_forward.1} parent=0 // pred_region
    _
  $region13: #{fashion_mnist_forward.1} parent=0 // pred_fallthru
    _
  // Predicated region
  $region14: #{fashion_mnist_forward.1} parent=0 // pred_check
    _
  $region15: #{fashion_mnist_forward.1} parent=0 // pred_check_branch
    %17 = sbr.rel (0) target = $region17
  $region16: #{fashion_mnist_forward.1} parent=0 // pred_region
    _
  $region17: #{fashion_mnist_forward.1} parent=0 // pred_fallthru
    _
  // Predicated region
  $region18: #{fashion_mnist_forward.1} parent=0 // pred_check
    _
  $region19: #{fashion_mnist_forward.1} parent=0 // pred_check_branch
    %19 = sbr.rel (0) target = $region21
  $region20: #{fashion_mnist_forward.1} parent=0 // pred_region
    _
  $region21: #{fashion_mnist_forward.1} parent=0 // pred_fallthru
    _
  %v21 = vld [vmem:[%s0] sm:$0xff]
  %v22 = vld [vmem:[%s0 + $0x8] sm:$0xff]
  %v23 = vld [vmem:[%s0 + $0x10] sm:$0xff]
  %v24 = vld [vmem:[%s0 + $0x18] sm:$0xf]
  %v25 = vld [vmem:[%s1] sm:$0xf]
  %v26 = vld [vmem:[%s1 + $0x4] sm:$0xf]
  %v27 = vld [vmem:[%s1 + $0x8] sm:$0xf]
  %v28 = vld [vmem:[%s1 + $0xc] sm:$0xf]
  %v29 = vld [vmem:[%s1 + $0x10] sm:$0xf]
  %v30 = vld [vmem:[%s1 + $0x14] sm:$0xf]
  %v31 = vld [vmem:[%s1 + $0x18] sm:$0xf]
  %v32 = vld [vmem:[%s1 + $0x1c] sm:$0xf]
  %v33 = vld [vmem:[%s1 + $0x20] sm:$0xf]
  %v34 = vld [vmem:[%s1 + $0x24] sm:$0xf]
  %v35 = vld [vmem:[%s1 + $0x28] sm:$0xf]
  %v36 = vld [vmem:[%s1 + $0x2c] sm:$0xf]
  %v37 = vld [vmem:[%s1 + $0x30] sm:$0xf]
  %v38 = vld [vmem:[%s1 + $0x34] sm:$0xf]
  %v39 = vld [vmem:[%s1 + $0x38] sm:$0xf]
  %v40 = vld [vmem:[%s1 + $0x3c] sm:$0xf]
  %v41 = vld [vmem:[%s1 + $0x40] sm:$0xf]
  %v42 = vld [vmem:[%s1 + $0x44] sm:$0xf]
  %v43 = vld [vmem:[%s1 + $0x48] sm:$0xf]
  %v44 = vld [vmem:[%s1 + $0x4c] sm:$0xf]
  %v45 = vld [vmem:[%s1 + $0x50] sm:$0xf]
  %v46 = vld [vmem:[%s1 + $0x54] sm:$0xf]
  %v47 = vld [vmem:[%s1 + $0x58] sm:$0xf]
  %v48 = vld [vmem:[%s1 + $0x5c] sm:$0xf]
  %v49 = vld [vmem:[%s1 + $0x60] sm:$0xf]
  %v50 = vld [vmem:[%s1 + $0x64] sm:$0xf]
  %v51 = vld [vmem:[%s1 + $0x68] sm:$0xf]
  %v52 = vld [vmem:[%s1 + $0x6c] sm:$0xf]
  %v53 = vld [vmem:[%s1 + $0x70] sm:$0xf]
  %v54 = vld [vmem:[%s1 + $0x74] sm:$0xf]
  %v55 = vld [vmem:[%s1 + $0x78] sm:$0xf]
  %v56 = vld [vmem:[%s1 + $0x7c] sm:$0xf]
  %v57 = vld [vmem:[%s1 + $0x80] sm:$0xf]
  %v58 = vld [vmem:[%s1 + $0x84] sm:$0xf]
  %v59 = vld [vmem:[%s1 + $0x88] sm:$0xf]
  %v60 = vld [vmem:[%s1 + $0x8c] sm:$0xf]
  %v61 = vld [vmem:[%s1 + $0x90] sm:$0xf]
  %v62 = vld [vmem:[%s1 + $0x94] sm:$0xf]
  %v63 = vld [vmem:[%s1 + $0x98] sm:$0xf]
  %v64 = vld [vmem:[%s1 + $0x9c] sm:$0xf]
  %v65 = vld [vmem:[%s1 + $0xa0] sm:$0xf]
  %v66 = vld [vmem:[%s1 + $0xa4] sm:$0xf]
  %v67 = vld [vmem:[%s1 + $0xa8] sm:$0xf]
  %v68 = vld [vmem:[%s1 + $0xac] sm:$0xf]
  %v69 = vld [vmem:[%s1 + $0xb0] sm:$0xf]
  %v70 = vld [vmem:[%s1 + $0xb4] sm:$0xf]
  %v71 = vld [vmem:[%s1 + $0xb8] sm:$0xf]
  %v72 = vld [vmem:[%s1 + $0xbc] sm:$0xf]
  %v73 = vld [vmem:[%s1 + $0xc0] sm:$0xf]
  %v74 = vld [vmem:[%s1 + $0xc4] sm:$0xf]
  %v75 = vld [vmem:[%s1 + $0xc8] sm:$0xf]
  %v76 = vld [vmem:[%s1 + $0xcc] sm:$0xf]
  %v77 = vld [vmem:[%s1 + $0xd0] sm:$0xf]
  %v78 = vld [vmem:[%s1 + $0xd4] sm:$0xf]
  %v79 = vld [vmem:[%s1 + $0xd8] sm:$0xf]
  %v80 = vld [vmem:[%s1 + $0xdc] sm:$0xf]
  %v81 = vld [vmem:[%s1 + $0xe0] sm:$0xf]
  %v82 = vld [vmem:[%s1 + $0xe4] sm:$0xf]
  %v83 = vld [vmem:[%s1 + $0xe8] sm:$0xf]
  %v84 = vld [vmem:[%s1 + $0xec] sm:$0xf]
  %v85 = vld [vmem:[%s1 + $0xf0] sm:$0xf]
  %v86 = vld [vmem:[%s1 + $0xf4] sm:$0xf]
  %v87 = vld [vmem:[%s1 + $0xf8] sm:$0xf]
  %v88 = vld [vmem:[%s1 + $0xfc] sm:$0xf]
  %v89 = vld [vmem:[%s1 + $0x100] sm:$0xf]
  %v90 = vld [vmem:[%s1 + $0x104] sm:$0xf]
  %v91 = vld [vmem:[%s1 + $0x108] sm:$0xf]
  %v92 = vld [vmem:[%s1 + $0x10c] sm:$0xf]
  %v93 = vld [vmem:[%s1 + $0x110] sm:$0xf]
  %v94 = vld [vmem:[%s1 + $0x114] sm:$0xf]
  %v95 = vld [vmem:[%s1 + $0x118] sm:$0xf]
  %v96 = vld [vmem:[%s1 + $0x11c] sm:$0xf]
  %v97 = vld [vmem:[%s1 + $0x120] sm:$0xf]
  %v98 = vld [vmem:[%s1 + $0x124] sm:$0xf]
  %v99 = vld [vmem:[%s1 + $0x128] sm:$0xf]
  %v100 = vld [vmem:[%s1 + $0x12c] sm:$0xf]
  %v101 = vld [vmem:[%s1 + $0x130] sm:$0xf]
  %v102 = vld [vmem:[%s1 + $0x134] sm:$0xf]
  %v103 = vld [vmem:[%s1 + $0x138] sm:$0xf]
  %v104 = vld [vmem:[%s1 + $0x13c] sm:$0xf]
  %v105 = vld [vmem:[%s1 + $0x140] sm:$0xf]
  %v106 = vld [vmem:[%s1 + $0x144] sm:$0xf]
  %v107 = vld [vmem:[%s1 + $0x148] sm:$0xf]
  %v108 = vld [vmem:[%s1 + $0x14c] sm:$0xf]
  %v109 = vld [vmem:[%s1 + $0x150] sm:$0xf]
  %v110 = vld [vmem:[%s1 + $0x154] sm:$0xf]
  %v111 = vld [vmem:[%s1 + $0x158] sm:$0xf]
  %v112 = vld [vmem:[%s1 + $0x15c] sm:$0xf]
  %v113 = vld [vmem:[%s1 + $0x160] sm:$0xf]
  %v114 = vld [vmem:[%s1 + $0x164] sm:$0xf]
  %v115 = vld [vmem:[%s1 + $0x168] sm:$0xf]
  %v116 = vld [vmem:[%s1 + $0x16c] sm:$0xf]
  %v117 = vld [vmem:[%s1 + $0x170] sm:$0xf]
  %v118 = vld [vmem:[%s1 + $0x174] sm:$0xf]
  %v119 = vld [vmem:[%s1 + $0x178] sm:$0xf]
  %v120 = vld [vmem:[%s1 + $0x17c] sm:$0xf]
  %v121 = vld [vmem:[%s1 + $0x180] sm:$0xf]
  %v122 = vld [vmem:[%s1 + $0x184] sm:$0xf]
  %v123 = vld [vmem:[%s2] sm:$0x1]
  %v125 = vlaneseq
  %v126 = vshrl.u32 %v125, 7
  %v127 = vsub.s32 0, %v126
  %v128 = vrot.slane %v123, %v127
  %v134 = vunpack.c.l.b16 %v21
  %v135 = vunpack.c.h.b16 %v21
  %v136 = vunpack.c.l.b16 %v22
  %v137 = vunpack.c.h.b16 %v22
  %v138 = vunpack.c.l.b16 %v23
  %v139 = vunpack.c.h.b16 %v23
  %v140 = vunpack.c.l.b16 %v24
  %v141 = vpack.c.b16 %v134, %v134
  %v142 = vpack.c.b16 %v135, %v135
  %v143 = vpack.c.b16 %v136, %v136
  %v144 = vpack.c.b16 %v137, %v137
  %v145 = vpack.c.b16 %v138, %v138
  %v146 = vpack.c.b16 %v139, %v139
  %v147 = vpack.c.b16 %v140, %v140
  %v252 = vunpack.c.l.b16 %v25
  %v253 = vunpack.c.l.b16 %v26
  %v254 = vunpack.c.l.b16 %v27
  %v255 = vunpack.c.l.b16 %v28
  %v256 = vunpack.c.l.b16 %v29
  %v257 = vunpack.c.l.b16 %v30
  %v258 = vunpack.c.l.b16 %v31
  %v259 = vunpack.c.l.b16 %v32
  %v260 = vunpack.c.l.b16 %v33
  %v261 = vunpack.c.l.b16 %v34
  %v262 = vunpack.c.l.b16 %v35
  %v263 = vunpack.c.l.b16 %v36
  %v264 = vunpack.c.l.b16 %v37
  %v265 = vunpack.c.l.b16 %v38
  %v266 = vunpack.c.l.b16 %v39
  %v267 = vunpack.c.l.b16 %v40
  %v268 = vunpack.c.l.b16 %v41
  %v269 = vunpack.c.l.b16 %v42
  %v270 = vunpack.c.l.b16 %v43
  %v271 = vunpack.c.l.b16 %v44
  %v272 = vunpack.c.l.b16 %v45
  %v273 = vunpack.c.l.b16 %v46
  %v274 = vunpack.c.l.b16 %v47
  %v275 = vunpack.c.l.b16 %v48
  %v276 = vunpack.c.l.b16 %v49
  %v277 = vunpack.c.l.b16 %v50
  %v278 = vunpack.c.l.b16 %v51
  %v279 = vunpack.c.l.b16 %v52
  %v280 = vunpack.c.l.b16 %v53
  %v281 = vunpack.c.l.b16 %v54
  %v282 = vunpack.c.l.b16 %v55
  %v283 = vunpack.c.l.b16 %v56
  %v284 = vunpack.c.l.b16 %v57
  %v285 = vunpack.c.l.b16 %v58
  %v286 = vunpack.c.l.b16 %v59
  %v287 = vunpack.c.l.b16 %v60
  %v288 = vunpack.c.l.b16 %v61
  %v289 = vunpack.c.l.b16 %v62
  %v290 = vunpack.c.l.b16 %v63
  %v291 = vunpack.c.l.b16 %v64
  %v292 = vunpack.c.l.b16 %v65
  %v293 = vunpack.c.l.b16 %v66
  %v294 = vunpack.c.l.b16 %v67
  %v295 = vunpack.c.l.b16 %v68
  %v296 = vunpack.c.l.b16 %v69
  %v297 = vunpack.c.l.b16 %v70
  %v298 = vunpack.c.l.b16 %v71
  %v299 = vunpack.c.l.b16 %v72
  %v300 = vunpack.c.l.b16 %v73
  %v301 = vunpack.c.l.b16 %v74
  %v302 = vunpack.c.l.b16 %v75
  %v303 = vunpack.c.l.b16 %v76
  %v304 = vunpack.c.l.b16 %v77
  %v305 = vunpack.c.l.b16 %v78
  %v306 = vunpack.c.l.b16 %v79
  %v307 = vunpack.c.l.b16 %v80
  %v308 = vunpack.c.l.b16 %v81
  %v309 = vunpack.c.l.b16 %v82
  %v310 = vunpack.c.l.b16 %v83
  %v311 = vunpack.c.l.b16 %v84
  %v312 = vunpack.c.l.b16 %v85
  %v313 = vunpack.c.l.b16 %v86
  %v314 = vunpack.c.l.b16 %v87
  %v315 = vunpack.c.l.b16 %v88
  %v316 = vunpack.c.l.b16 %v89
  %v317 = vunpack.c.l.b16 %v90
  %v318 = vunpack.c.l.b16 %v91
  %v319 = vunpack.c.l.b16 %v92
  %v320 = vunpack.c.l.b16 %v93
  %v321 = vunpack.c.l.b16 %v94
  %v322 = vunpack.c.l.b16 %v95
  %v323 = vunpack.c.l.b16 %v96
  %v324 = vunpack.c.l.b16 %v97
  %v325 = vunpack.c.l.b16 %v98
  %v326 = vunpack.c.l.b16 %v99
  %v327 = vunpack.c.l.b16 %v100
  %v328 = vunpack.c.l.b16 %v101
  %v329 = vunpack.c.l.b16 %v102
  %v330 = vunpack.c.l.b16 %v103
  %v331 = vunpack.c.l.b16 %v104
  %v332 = vunpack.c.l.b16 %v105
  %v333 = vunpack.c.l.b16 %v106
  %v334 = vunpack.c.l.b16 %v107
  %v335 = vunpack.c.l.b16 %v108
  %v336 = vunpack.c.l.b16 %v109
  %v337 = vunpack.c.l.b16 %v110
  %v338 = vunpack.c.l.b16 %v111
  %v339 = vunpack.c.l.b16 %v112
  %v340 = vunpack.c.l.b16 %v113
  %v341 = vunpack.c.l.b16 %v114
  %v342 = vunpack.c.l.b16 %v115
  %v343 = vunpack.c.l.b16 %v116
  %v344 = vunpack.c.l.b16 %v117
  %v345 = vunpack.c.l.b16 %v118
  %v346 = vunpack.c.l.b16 %v119
  %v347 = vunpack.c.l.b16 %v120
  %v348 = vunpack.c.l.b16 %v121
  %v349 = vunpack.c.l.b16 %v122
  %v350 = vpack.c.b16 %v253, %v252
  %v351 = vpack.c.b16 %v255, %v254
  %v352 = vpack.c.b16 %v257, %v256
  %v353 = vpack.c.b16 %v259, %v258
  %v354 = vpack.c.b16 %v261, %v260
  %v355 = vpack.c.b16 %v263, %v262
  %v356 = vpack.c.b16 %v265, %v264
  %v357 = vpack.c.b16 %v267, %v266
  %v358 = vpack.c.b16 %v269, %v268
  %v359 = vpack.c.b16 %v271, %v270
  %v360 = vpack.c.b16 %v273, %v272
  %v361 = vpack.c.b16 %v275, %v274
  %v362 = vpack.c.b16 %v277, %v276
  %v363 = vpack.c.b16 %v279, %v278
  %v364 = vpack.c.b16 %v281, %v280
  %v365 = vpack.c.b16 %v283, %v282
  %v366 = vpack.c.b16 %v285, %v284
  %v367 = vpack.c.b16 %v287, %v286
  %v368 = vpack.c.b16 %v289, %v288
  %v369 = vpack.c.b16 %v291, %v290
  %v370 = vpack.c.b16 %v293, %v292
  %v371 = vpack.c.b16 %v295, %v294
  %v372 = vpack.c.b16 %v297, %v296
  %v373 = vpack.c.b16 %v299, %v298
  %v374 = vpack.c.b16 %v301, %v300
  %v375 = vpack.c.b16 %v303, %v302
  %v376 = vpack.c.b16 %v305, %v304
  %v377 = vpack.c.b16 %v307, %v306
  %v378 = vpack.c.b16 %v309, %v308
  %v379 = vpack.c.b16 %v311, %v310
  %v380 = vpack.c.b16 %v313, %v312
  %v381 = vpack.c.b16 %v315, %v314
  %v382 = vpack.c.b16 %v317, %v316
  %v383 = vpack.c.b16 %v319, %v318
  %v384 = vpack.c.b16 %v321, %v320
  %v385 = vpack.c.b16 %v323, %v322
  %v386 = vpack.c.b16 %v325, %v324
  %v387 = vpack.c.b16 %v327, %v326
  %v388 = vpack.c.b16 %v329, %v328
  %v389 = vpack.c.b16 %v331, %v330
  %v390 = vpack.c.b16 %v333, %v332
  %v391 = vpack.c.b16 %v335, %v334
  %v392 = vpack.c.b16 %v337, %v336
  %v393 = vpack.c.b16 %v339, %v338
  %v394 = vpack.c.b16 %v341, %v340
  %v395 = vpack.c.b16 %v343, %v342
  %v396 = vpack.c.b16 %v345, %v344
  %v397 = vpack.c.b16 %v347, %v346
  %v398 = vpack.c.b16 %v349, %v348
  %vm448 = vcmask 130048
  %v450 = vsel %vm448, %v147, 0
  %452 = vmatprep.subr.bf16.mxu0 0
  %453 = vmatpush1.bf16.msra.mxu0 %v350
  %454 = vmatprep.subr.bf16.mxu0 0
  %455 = vmatpush1.bf16.msra.mxu0 %v351
  %456 = vmatprep.subr.bf16.mxu0 0
  %457 = vmatpush1.bf16.msra.mxu0 %v352
  %458 = vmatprep.subr.bf16.mxu0 0
  %459 = vmatpush1.bf16.msra.mxu0 %v353
  %460 = vmatprep.subr.bf16.mxu0 0
  %461 = vmatpush1.bf16.msra.mxu0 %v354
  %462 = vmatprep.subr.bf16.mxu0 0
  %463 = vmatpush1.bf16.msra.mxu0 %v355
  %464 = vmatprep.subr.bf16.mxu0 0
  %465 = vmatpush1.bf16.msra.mxu0 %v356
  %466 = vmatprep.subr.bf16.mxu0 0
  %467 = vmatpush1.bf16.msra.mxu0 %v357
  %468 = vmatprep.subr.bf16.mxu0 0
  %469 = vmatpush1.bf16.msra.mxu0 %v358
  %470 = vmatprep.subr.bf16.mxu0 0
  %471 = vmatpush1.bf16.msra.mxu0 %v359
  %472 = vmatprep.subr.bf16.mxu0 0
  %473 = vmatpush1.bf16.msra.mxu0 %v360
  %474 = vmatprep.subr.bf16.mxu0 0
  %475 = vmatpush1.bf16.msra.mxu0 %v361
  %476 = vmatprep.subr.bf16.mxu0 0
  %477 = vmatpush1.bf16.msra.mxu0 %v362
  %478 = vmatprep.subr.bf16.mxu0 0
  %479 = vmatpush1.bf16.msra.mxu0 %v363
  %480 = vmatprep.subr.bf16.mxu0 0
  %481 = vmatpush1.bf16.msra.mxu0 %v364
  %482 = vmatprep.subr.bf16.mxu0 0
  %483 = vmatpush1.bf16.msra.mxu0 %v365
  %484 = vmatprep.mubr.bf16.mxu0 %v142
  %485 = vmatmul.mubr.bf16.gmra.mrb[0].mxu0 %v141
  %v486 = vpop.f32.mrb[0].mxu0
  %v487 = vadd.f32 %v128, %v486
  %v488 = vpop.f32.mrb[0].mxu0
  %v489 = vpop.f32.mrb[0].mxu0
  %v490 = vpop.f32.mrb[0].mxu0
  %491 = vdwg.mxu0
  %492 = vmatprep.subr.bf16.mxu0 0
  %493 = vmatpush1.bf16.msra.mxu0 %v366
  %494 = vmatprep.subr.bf16.mxu0 0
  %495 = vmatpush1.bf16.msra.mxu0 %v367
  %496 = vmatprep.subr.bf16.mxu0 0
  %497 = vmatpush1.bf16.msra.mxu0 %v368
  %498 = vmatprep.subr.bf16.mxu0 0
  %499 = vmatpush1.bf16.msra.mxu0 %v369
  %500 = vmatprep.subr.bf16.mxu0 0
  %501 = vmatpush1.bf16.msra.mxu0 %v370
  %502 = vmatprep.subr.bf16.mxu0 0
  %503 = vmatpush1.bf16.msra.mxu0 %v371
  %504 = vmatprep.subr.bf16.mxu0 0
  %505 = vmatpush1.bf16.msra.mxu0 %v372
  %506 = vmatprep.subr.bf16.mxu0 0
  %507 = vmatpush1.bf16.msra.mxu0 %v373
  %508 = vmatprep.subr.bf16.mxu0 0
  %509 = vmatpush1.bf16.msra.mxu0 %v374
  %510 = vmatprep.subr.bf16.mxu0 0
  %511 = vmatpush1.bf16.msra.mxu0 %v375
  %512 = vmatprep.subr.bf16.mxu0 0
  %513 = vmatpush1.bf16.msra.mxu0 %v376
  %514 = vmatprep.subr.bf16.mxu0 0
  %515 = vmatpush1.bf16.msra.mxu0 %v377
  %516 = vmatprep.subr.bf16.mxu0 0
  %517 = vmatpush1.bf16.msra.mxu0 %v378
  %518 = vmatprep.subr.bf16.mxu0 0
  %519 = vmatpush1.bf16.msra.mxu0 %v379
  %520 = vmatprep.subr.bf16.mxu0 0
  %521 = vmatpush1.bf16.msra.mxu0 %v380
  %522 = vmatprep.subr.bf16.mxu0 0
  %523 = vmatpush1.bf16.msra.mxu0 %v381
  %524 = vmatprep.mubr.bf16.mxu0 %v144
  %525 = vmatmul.mubr.bf16.gmra.mrb[0].mxu0 %v143
  %v526 = vpop.f32.mrb[0].mxu0
  %v527 = vadd.f32 %v487, %v526
  %v528 = vpop.f32.mrb[0].mxu0
  %v529 = vpop.f32.mrb[0].mxu0
  %v530 = vpop.f32.mrb[0].mxu0
  %531 = vdwg.mxu0
  %532 = vmatprep.subr.bf16.mxu0 0
  %533 = vmatpush1.bf16.msra.mxu0 %v382
  %534 = vmatprep.subr.bf16.mxu0 0
  %535 = vmatpush1.bf16.msra.mxu0 %v383
  %536 = vmatprep.subr.bf16.mxu0 0
  %537 = vmatpush1.bf16.msra.mxu0 %v384
  %538 = vmatprep.subr.bf16.mxu0 0
  %539 = vmatpush1.bf16.msra.mxu0 %v385
  %540 = vmatprep.subr.bf16.mxu0 0
  %541 = vmatpush1.bf16.msra.mxu0 %v386
  %542 = vmatprep.subr.bf16.mxu0 0
  %543 = vmatpush1.bf16.msra.mxu0 %v387
  %544 = vmatprep.subr.bf16.mxu0 0
  %545 = vmatpush1.bf16.msra.mxu0 %v388
  %546 = vmatprep.subr.bf16.mxu0 0
  %547 = vmatpush1.bf16.msra.mxu0 %v389
  %548 = vmatprep.subr.bf16.mxu0 0
  %549 = vmatpush1.bf16.msra.mxu0 %v390
  %550 = vmatprep.subr.bf16.mxu0 0
  %551 = vmatpush1.bf16.msra.mxu0 %v391
  %552 = vmatprep.subr.bf16.mxu0 0
  %553 = vmatpush1.bf16.msra.mxu0 %v392
  %554 = vmatprep.subr.bf16.mxu0 0
  %555 = vmatpush1.bf16.msra.mxu0 %v393
  %556 = vmatprep.subr.bf16.mxu0 0
  %557 = vmatpush1.bf16.msra.mxu0 %v394
  %558 = vmatprep.subr.bf16.mxu0 0
  %559 = vmatpush1.bf16.msra.mxu0 %v395
  %560 = vmatprep.subr.bf16.mxu0 0
  %561 = vmatpush1.bf16.msra.mxu0 %v396
  %562 = vmatprep.subr.bf16.mxu0 0
  %563 = vmatpush1.bf16.msra.mxu0 %v397
  %564 = vmatprep.mubr.bf16.mxu0 %v146
  %565 = vmatmul.mubr.bf16.gmra.mrb[0].mxu0 %v145
  %v566 = vpop.f32.mrb[0].mxu0
  %v567 = vadd.f32 %v527, %v566
  %v568 = vpop.f32.mrb[0].mxu0
  %v569 = vpop.f32.mrb[0].mxu0
  %v570 = vpop.f32.mrb[0].mxu0
  %571 = vdwg.mxu0
  %572 = vmatprep.subr.bf16.mxu0 0
  %573 = vmatpush1.bf16.msra.mxu0 %v398
  %574 = vmatprep.subr.bf16.mxu0 0
  %575 = vmatpush1.bf16.msra.mxu0 0
  %576 = vmatprep.subr.bf16.mxu0 0
  %577 = vmatpush1.bf16.msra.mxu0 0
  %578 = vmatprep.subr.bf16.mxu0 0
  %579 = vmatpush1.bf16.msra.mxu0 0
  %580 = vmatprep.subr.bf16.mxu0 0
  %581 = vmatpush1.bf16.msra.mxu0 0
  %582 = vmatprep.subr.bf16.mxu0 0
  %583 = vmatpush1.bf16.msra.mxu0 0
  %584 = vmatprep.subr.bf16.mxu0 0
  %585 = vmatpush1.bf16.msra.mxu0 0
  %586 = vmatprep.subr.bf16.mxu0 0
  %587 = vmatpush1.bf16.msra.mxu0 0
  %588 = vmatprep.subr.bf16.mxu0 0
  %589 = vmatpush1.bf16.msra.mxu0 0
  %590 = vmatprep.subr.bf16.mxu0 0
  %591 = vmatpush1.bf16.msra.mxu0 0
  %592 = vmatprep.subr.bf16.mxu0 0
  %593 = vmatpush1.bf16.msra.mxu0 0
  %594 = vmatprep.subr.bf16.mxu0 0
  %595 = vmatpush1.bf16.msra.mxu0 0
  %596 = vmatprep.subr.bf16.mxu0 0
  %597 = vmatpush1.bf16.msra.mxu0 0
  %598 = vmatprep.subr.bf16.mxu0 0
  %599 = vmatpush1.bf16.msra.mxu0 0
  %600 = vmatprep.subr.bf16.mxu0 0
  %601 = vmatpush1.bf16.msra.mxu0 0
  %602 = vmatprep.subr.bf16.mxu0 0
  %603 = vmatpush1.bf16.msra.mxu0 0
  %604 = vmatprep.mubr.bf16.mxu0 0
  %605 = vmatmul.mubr.bf16.gmra.mrb[0].mxu0 %v450
  %v606 = vpop.f32.mrb[0].mxu0
  %v607 = vadd.f32 %v567, %v606
  %v608 = vpop.f32.mrb[0].mxu0
  %v609 = vpop.f32.mrb[0].mxu0
  %v610 = vpop.f32.mrb[0].mxu0
  %611 = vdwg.mxu0
  %v612 = vsub.f32 0.0, %v607
  %v613 = vmul.f32 %v612, 1.442695
  %v614 = vpow.pop %v613
  %v615 = vadd.f32 %v614, 1.0
  %v616 = vrcp.pop %v615
  %v617 = vpack.c.bf16 %v616, %v616
  %v618 = vld [vmem:[%s3] sm:$0xf]
  %v619 = vld [vmem:[%s3 + $0x4] sm:$0xf]
  %v620 = vld [vmem:[%s3 + $0x8] sm:$0xf]
  %v621 = vld [vmem:[%s3 + $0xc] sm:$0xf]
  %v622 = vld [vmem:[%s3 + $0x10] sm:$0xf]
  %v623 = vld [vmem:[%s3 + $0x14] sm:$0xf]
  %v624 = vld [vmem:[%s3 + $0x18] sm:$0xf]
  %v625 = vld [vmem:[%s3 + $0x1c] sm:$0xf]
  %v626 = vld [vmem:[%s3 + $0x20] sm:$0xf]
  %v627 = vld [vmem:[%s3 + $0x24] sm:$0xf]
  %v628 = vld [vmem:[%s3 + $0x28] sm:$0xf]
  %v629 = vld [vmem:[%s3 + $0x2c] sm:$0xf]
  %v630 = vld [vmem:[%s3 + $0x30] sm:$0xf]
  %v631 = vld [vmem:[%s3 + $0x34] sm:$0xf]
  %v632 = vld [vmem:[%s3 + $0x38] sm:$0xf]
  %v633 = vld [vmem:[%s3 + $0x3c] sm:$0xf]
  %v634 = vld [vmem:[%s4] sm:$0x1]
  %v636 = vlaneseq
  %v637 = vshrl.u32 %v636, 7
  %v638 = vsub.s32 0, %v637
  %v639 = vrot.slane %v634, %v638
  %v657 = vunpack.c.l.b16 %v618
  %v658 = vunpack.c.l.b16 %v619
  %v659 = vunpack.c.l.b16 %v620
  %v660 = vunpack.c.l.b16 %v621
  %v661 = vunpack.c.l.b16 %v622
  %v662 = vunpack.c.l.b16 %v623
  %v663 = vunpack.c.l.b16 %v624
  %v664 = vunpack.c.l.b16 %v625
  %v665 = vunpack.c.l.b16 %v626
  %v666 = vunpack.c.l.b16 %v627
  %v667 = vunpack.c.l.b16 %v628
  %v668 = vunpack.c.l.b16 %v629
  %v669 = vunpack.c.l.b16 %v630
  %v670 = vunpack.c.l.b16 %v631
  %v671 = vunpack.c.l.b16 %v632
  %v672 = vunpack.c.l.b16 %v633
  %v673 = vpack.c.b16 %v658, %v657
  %v674 = vpack.c.b16 %v660, %v659
  %v675 = vpack.c.b16 %v662, %v661
  %v676 = vpack.c.b16 %v664, %v663
  %v677 = vpack.c.b16 %v666, %v665
  %v678 = vpack.c.b16 %v668, %v667
  %v679 = vpack.c.b16 %v670, %v669
  %v680 = vpack.c.b16 %v672, %v671
  %689 = vmatprep.subr.bf16.mxu0 0
  %690 = vmatpush1.bf16.msra.mxu0 %v673
  %691 = vmatprep.subr.bf16.mxu0 0
  %692 = vmatpush1.bf16.msra.mxu0 %v674
  %693 = vmatprep.subr.bf16.mxu0 0
  %694 = vmatpush1.bf16.msra.mxu0 %v675
  %695 = vmatprep.subr.bf16.mxu0 0
  %696 = vmatpush1.bf16.msra.mxu0 %v676
  %697 = vmatprep.subr.bf16.mxu0 0
  %698 = vmatpush1.bf16.msra.mxu0 %v677
  %699 = vmatprep.subr.bf16.mxu0 0
  %700 = vmatpush1.bf16.msra.mxu0 %v678
  %701 = vmatprep.subr.bf16.mxu0 0
  %702 = vmatpush1.bf16.msra.mxu0 %v679
  %703 = vmatprep.subr.bf16.mxu0 0
  %704 = vmatpush1.bf16.msra.mxu0 %v680
  %705 = vmatprep.subr.bf16.mxu0 0
  %706 = vmatpush1.bf16.msra.mxu0 0
  %707 = vmatprep.subr.bf16.mxu0 0
  %708 = vmatpush1.bf16.msra.mxu0 0
  %709 = vmatprep.subr.bf16.mxu0 0
  %710 = vmatpush1.bf16.msra.mxu0 0
  %711 = vmatprep.subr.bf16.mxu0 0
  %712 = vmatpush1.bf16.msra.mxu0 0
  %713 = vmatprep.subr.bf16.mxu0 0
  %714 = vmatpush1.bf16.msra.mxu0 0
  %715 = vmatprep.subr.bf16.mxu0 0
  %716 = vmatpush1.bf16.msra.mxu0 0
  %717 = vmatprep.subr.bf16.mxu0 0
  %718 = vmatpush1.bf16.msra.mxu0 0
  %719 = vmatprep.subr.bf16.mxu0 0
  %720 = vmatpush1.bf16.msra.mxu0 0
  %721 = vmatprep.mubr.bf16.mxu0 0
  %722 = vmatmul.mubr.bf16.gmra.mrb[0].mxu0 %v617
  %v723 = vpop.f32.mrb[0].mxu0
  %v724 = vadd.f32 %v639, %v723
  %v725 = vpop.f32.mrb[0].mxu0
  %v726 = vpop.f32.mrb[0].mxu0
  %v727 = vpop.f32.mrb[0].mxu0
  %728 = vdwg.mxu0
  %729 = vmax.xlane.f32.xlu0 %v724
  %v730 = vpop.xlane.xlu0 %729
  %v731 = vsub.f32 %v724, %v730
  %v732 = vmul.f32 %v731, 1.442695
  %v733 = vpow.pop %v732
  %734 = vadd.xlane.f32.xlu0 %v733
  %v735 = vpop.xlane.xlu0 %734
  %v736 = vrcp.pop %v735
  %v737 = vmul.f32 %v733, %v736
  %v738 = vpack.c.bf16 %v737, %v737
  %739 = vst [vmem:[%s5] sm:$0xf] %v738
  // Predicated region
  $region22: #{fashion_mnist_forward.1} parent=0 // pred_check
    _
  $region23: #{fashion_mnist_forward.1} parent=0 // pred_check_branch
    %741 = sbr.rel (0) target = $region25
  $region24: #{fashion_mnist_forward.1} parent=0 // pred_region
    _
  $region25: #{fashion_mnist_forward.1} parent=0 // pred_fallthru
    _
  // Predicated region
  $region26: #{fashion_mnist_forward.1} parent=0 // pred_check
    _
  $region27: #{fashion_mnist_forward.1} parent=0 // pred_check_branch
    %743 = sbr.rel (0) target = $region29
  $region28: #{fashion_mnist_forward.1} parent=0 // pred_region
    _
  $region29: #{fashion_mnist_forward.1} parent=0 // pred_fallthru
    _

</llo_original>
